<compile_context>
chip_gen: v6e
topology: v6e:2x2x1
jax: 0.10.0
libtpu: 0.0.40
codegen_flags: <defaults>
</compile_context>

<pallas_src>
import functools

import jax
import jax.numpy as jnp
from jax.experimental import pallas as pl
from jax.experimental.pallas import tpu as pltpu


def _round_up(x, m):
    return ((x + m - 1) // m) * m


def _cdiv(a, b):
    return -(-a // b)


def _pool_head_single_kernel(x_ref, w_ref, b_ref, out_ref, *, inv_hw):
    # x_ref:  (TB, C, HW)  native-layout batch tile (raw dtype)
    # w_ref:  (C, NC)      resident f32 head weight (transposed, class-padded)
    # b_ref:  (1, NC)      resident f32 head bias (class-padded)
    # out_ref:(TB, NC)     f32 logits tile
    pooled = jnp.sum(x_ref[...], axis=-1, dtype=jnp.float32) * inv_hw
    logits = jnp.dot(pooled, w_ref[...], preferred_element_type=jnp.float32)
    out_ref[...] = (logits + b_ref[...]).astype(out_ref.dtype)


def _pool_head_stream_kernel(x_ref, w_ref, b_ref, out_ref, acc_ref, *,
                             inv_hw, hw, thw, ragged):
    # Streaming spatial-sum: grid = (batch tiles, spatial tiles); acc_ref
    # persists across the (last, "arbitrary") spatial axis.
    s = pl.program_id(1)

    @pl.when(s == 0)
    def _():
        acc_ref[...] = jnp.zeros_like(acc_ref)

    x = x_ref[...]
    if ragged:
        # Mask the out-of-bounds tail of the last spatial tile (OOB block data
        # is undefined and would otherwise corrupt the sum).
        col = jax.lax.broadcasted_iota(jnp.int32, x.shape, dimension=2)
        x = jnp.where(col + s * thw < hw, x, jnp.zeros_like(x))
    acc_ref[...] += jnp.sum(x, axis=-1, dtype=jnp.float32)

    @pl.when(s == pl.num_programs(1) - 1)
    def _():
        pooled = acc_ref[...] * inv_hw
        logits = jnp.dot(pooled, w_ref[...], preferred_element_type=jnp.float32)
        out_ref[...] = (logits + b_ref[...]).astype(out_ref.dtype)


def vit_forward(x_nchw, head_w, head_b, *, batch_tile=64, target_tile_bytes=8 << 20):
    """Replicates VIT.forward: returns (class_output, features)."""
    B, C, H, W = x_nchw.shape
    HW = H * W
    num_classes = head_w.shape[0]
    dtype = x_nchw.dtype
    itemsize = jnp.dtype(dtype).itemsize

    x_bcs = x_nchw.reshape(B, C, HW)          # contiguous view, no HBM copy

    # --- tiling ---------------------------------------------------------------
    B8 = _round_up(B, 8)
    tb_desired = _round_up(max(8, min(int(batch_tile), 128)), 8)

    full_row_bytes = C * HW * itemsize        # one batch row, full spatial extent
    tb_fit = (target_tile_bytes // max(1, full_row_bytes)) // 8 * 8
    if tb_fit >= 8:
        # Whole spatial extent fits: collapse the spatial grid axis (no scratch).
        TB = max(8, min(tb_desired, tb_fit, B8))
        n_s, THW = 1, HW
    else:
        # Huge feature map: stream 128-lane-aligned spatial tiles per batch tile.
        TB = 8
        thw_fit = (target_tile_bytes // (TB * C * itemsize)) // 128 * 128
        THW = max(128, thw_fit)
        if THW >= HW:
            n_s, THW = 1, HW
        else:
            n_s = _cdiv(HW, THW)

    # Keep >= 2 batch tiles when the batch allows it (v7x has 2 TensorCores and
    # shards the "parallel" grid axis across them).
    if B8 >= 16 and _cdiv(B8, TB) < 2:
        TB = _round_up(_cdiv(B8, 2), 8)
    B_pad = _round_up(B, TB)

    NC = _round_up(num_classes, 128)          # lane-dense, unmasked output stores

    # --- small resident head params (pre-cast to f32, class-padded) ------------
    w_t = jnp.pad(head_w.astype(jnp.float32).T, ((0, 0), (0, NC - num_classes)))
    b2 = jnp.pad(head_b.astype(jnp.float32).reshape(1, num_classes),
                 ((0, 0), (0, NC - num_classes)))

    # --- VMEM budget: 2x streamed x tile + 2x resident params + acc + 2x out ---
    x_tile_bytes = TB * C * THW * itemsize
    const_bytes = (C * NC + NC) * 4
    acc_bytes = TB * C * 4 if n_s > 1 else 0
    out_bytes = TB * NC * 4
    vmem_est = 2 * x_tile_bytes + 2 * const_bytes + acc_bytes + 2 * out_bytes
    vmem_limit = int(min(max(vmem_est + (2 << 20), 8 << 20), 32 << 20))

    inv_hw = 1.0 / float(HW)

    if n_s == 1:
        kernel = functools.partial(_pool_head_single_kernel, inv_hw=inv_hw)
        grid = (B_pad // TB,)
        in_specs = [
            pl.BlockSpec((TB, C, HW), lambda b: (b, 0, 0)),   # streamed x tile
            pl.BlockSpec((C, NC), lambda b: (0, 0)),          # resident W^T
            pl.BlockSpec((1, NC), lambda b: (0, 0)),          # resident bias
        ]
        out_specs = pl.BlockSpec((TB, NC), lambda b: (b, 0))
        scratch_shapes = ()
        dim_sem = ("parallel",)
    else:
        kernel = functools.partial(_pool_head_stream_kernel, inv_hw=inv_hw,
                                   hw=HW, thw=THW, ragged=(HW % THW != 0))
        grid = (B_pad // TB, n_s)                              # reduction axis last
        in_specs = [
            pl.BlockSpec((TB, C, THW), lambda b, s: (b, 0, s)),
            pl.BlockSpec((C, NC), lambda b, s: (0, 0)),
            pl.BlockSpec((1, NC), lambda b, s: (0, 0)),
        ]
        out_specs = pl.BlockSpec((TB, NC), lambda b, s: (b, 0))
        scratch_shapes = (pltpu.VMEM((TB, C), jnp.float32),)
        dim_sem = ("parallel", "arbitrary")

    out = pl.pallas_call(
        kernel,
        out_shape=jax.ShapeDtypeStruct((B_pad, NC), jnp.float32),
        grid_spec=pltpu.PrefetchScalarGridSpec(
            num_scalar_prefetch=0,
            grid=grid,
            in_specs=in_specs,
            out_specs=out_specs,
            scratch_shapes=scratch_shapes,
        ),
        compiler_params=pltpu.CompilerParams(
            dimension_semantics=dim_sem,
            vmem_limit_bytes=vmem_limit,
        ),
    )(x_bcs, w_t, b2)

    class_output = out[:B, :num_classes].astype(dtype)
    return class_output, x_nchw


if __name__ == "__main__":
    key = jax.random.PRNGKey(0)
    # (B, embed_dim, H, W) feature maps — VIT.forward pools them and applies the head.
    B, embed_dim, H, W = 2, 32, 8, 8
    num_classes = 16

    kx, kw, kx2 = jax.random.split(key, 3)
    x = jax.random.normal(kx, (B, embed_dim, H, W), dtype=jnp.float32)

    # Deterministic params mirroring _init_weights for nn.Linear:
    # weight ~ trunc_normal(std=0.02), bias = 0.
    head_w = 0.02 * jax.random.truncated_normal(
        kw, -2.0, 2.0, (num_classes, embed_dim), dtype=jnp.float32)
    head_b = jnp.zeros((num_classes,), dtype=jnp.float32)

    # Path 1: whole spatial extent in one tile (typical ViT feature maps).
    class_output, features = vit_forward(x, head_w, head_b)
    jax.block_until_ready((class_output, features))

    ref_cls = x.mean(axis=(2, 3)) @ head_w.T + head_b
    assert class_output.shape == (B, num_classes)
    assert features.shape == x.shape
    assert jnp.allclose(class_output, ref_cls, atol=1e-5, rtol=1e-5)
    assert jnp.array_equal(features, x)

    # Path 2: streaming spatial reduction with a ragged, iota-masked last tile
    # (forced by a deliberately tiny tile budget).
    x2 = jax.random.normal(kx2, (B, embed_dim, 20, 20), dtype=jnp.float32)
    cls2, feat2 = vit_forward(x2, head_w, head_b, target_tile_bytes=128 * 1024)
    jax.block_until_ready((cls2, feat2))
    ref2 = x2.mean(axis=(2, 3)) @ head_w.T + head_b
    assert jnp.allclose(cls2, ref2, atol=1e-5, rtol=1e-5)
    assert jnp.array_equal(feat2, x2)

    print("KERNEL_OK")
</pallas_src>

<mosaic_0001>
module attributes {stable_mosaic.version = 11 : i64} {
  func.func @_pool_head_single_kernel(%arg0: i32, %arg1: memref<8x32x64xf32, #tpu.memory_space<vmem>>, %arg2: memref<32x128xf32, #tpu.memory_space<vmem>>, %arg3: memref<1x128xf32, #tpu.memory_space<vmem>>, %arg4: memref<8x128xf32, #tpu.memory_space<vmem>>) attributes {dimension_semantics = [#tpu.dimension_semantics<parallel>], iteration_bounds = array<i64: 1>, scalar_prefetch = 0 : i64, scratch_operands = 0 : i64, tpu.core_type = #tpu.core_type<tc>, window_params = [{transform_indices = @transform_0, window_bounds = array<i64: 8, 32, 64>}, {pipeline_mode = #tpu.pipeline_mode<synchronous>, transform_indices = @transform_1, window_bounds = array<i64: 32, 128>}, {pipeline_mode = #tpu.pipeline_mode<synchronous>, transform_indices = @transform_2, window_bounds = array<i64: 1, 128>}, {transform_indices = @transform_3, window_bounds = array<i64: 8, 128>}]} {
    %c0 = arith.constant 0 : index
    %c0_0 = arith.constant 0 : index
    %c0_1 = arith.constant 0 : index
    %0 = vector.load %arg1[%c0, %c0_0, %c0_1] : memref<8x32x64xf32, #tpu.memory_space<vmem>>, vector<8x32x64xf32>
    %cst = arith.constant dense<0.000000e+00> : vector<8x32xf32>
    %1 = vector.multi_reduction <add>, %0, %cst [2] : vector<8x32x64xf32> to vector<8x32xf32>
    %cst_2 = arith.constant 1.562500e-02 : f32
    %2 = vector.broadcast %cst_2 : f32 to vector<8x32xf32>
    %3 = arith.mulf %1, %2 : vector<8x32xf32>
    %c0_3 = arith.constant 0 : index
    %c0_4 = arith.constant 0 : index
    %4 = vector.load %arg2[%c0_3, %c0_4] : memref<32x128xf32, #tpu.memory_space<vmem>>, vector<32x128xf32>
    %cst_5 = arith.constant dense<0.000000e+00> : vector<8x128xf32>
    %5 = tpu.matmul %3, %4, %cst_5 {dimension_numbers = #tpu.dot_dimension_numbers<[1], [0], [0], [1], [0, 0, 1, 1], [], []>} : vector<8x32xf32>, vector<32x128xf32>, vector<8x128xf32> -> vector<8x128xf32>
    %c0_6 = arith.constant 0 : index
    %c0_7 = arith.constant 0 : index
    %6 = vector.load %arg3[%c0_6, %c0_7] : memref<1x128xf32, #tpu.memory_space<vmem>>, vector<1x128xf32>
    %7 = vector.broadcast %6 : vector<1x128xf32> to vector<8x128xf32>
    %8 = arith.addf %5, %7 : vector<8x128xf32>
    %c0_8 = arith.constant 0 : index
    %c0_9 = arith.constant 0 : index
    %9 = vector.load %arg4[%c0_8, %c0_9] : memref<8x128xf32, #tpu.memory_space<vmem>>, vector<8x128xf32>
    tpu.vector_store %arg4[%c0_8, %c0_9], %8 {strides = array<i32>} : memref<8x128xf32, #tpu.memory_space<vmem>>, vector<8x128xf32>,
    return
  }
  func.func @transform_0(%arg0: i32) -> (i32, i32, i32) {
    %c0_i32 = arith.constant 0 : i32
    %c0_i32_0 = arith.constant 0 : i32
    %c0_i32_1 = arith.constant 0 : i32
    return %arg0, %c0_i32, %c0_i32_0 : i32, i32, i32
  }
  func.func @transform_1(%arg0: i32) -> (i32, i32) {
    %c0_i32 = arith.constant 0 : i32
    %c0_i32_0 = arith.constant 0 : i32
    %c0_i32_1 = arith.constant 0 : i32
    return %c0_i32, %c0_i32_0 : i32, i32
  }
  func.func @transform_2(%arg0: i32) -> (i32, i32) {
    %c0_i32 = arith.constant 0 : i32
    %c0_i32_0 = arith.constant 0 : i32
    %c0_i32_1 = arith.constant 0 : i32
    return %c0_i32, %c0_i32_0 : i32, i32
  }
  func.func @transform_3(%arg0: i32) -> (i32, i32) {
    %c0_i32 = arith.constant 0 : i32
    %c0_i32_0 = arith.constant 0 : i32
    return %arg0, %c0_i32 : i32, i32
  }
}

</mosaic_0001>

<llo_original>
// kernel: tpu_custom_call.1
$region0: #{tpu_custom_call.1}
  #allocation0 [shape = 'u32[]', space=smem, size = 0x4, offset = 0x4, fixed_abs, tag = 'smem constant byte address 0x4 - core index']
  #allocation1 [shape = 'u32[144,128]{1,0:T(1,128)}', space=vmem, size = 0x12000, scoped, tag = 'internal scratch']
  %s0 = inlined_call_operand.hbm [shape: f32[2,32,64], index: 0, kind: input, shape index: {}]
  %s1 = inlined_call_operand.hbm [shape: f32[32,128], index: 1, kind: input, shape index: {}]
  %s2 = inlined_call_operand.vmem [shape: f32[1,128], index: 2, kind: input, shape index: {}]
  %s3 = inlined_call_operand.hbm [shape: f32[8,128], index: 3, kind: output, shape index: {}]
  %s4 = sld [smem:[#allocation0]]
  $region30: #{tpu_custom_call.1} parent=0
    _
  %s6 = ssub.s32 1, %s4
  %s7 = scalar_select 0, %s6, %s4
  $region1: #{tpu_custom_call.1} parent=0
    #allocation2 [shape = 'u8[131072]{0}', space=vmem, size = 0x20000, scoped, tag = 'input window, operand 0, single buffered']
    #allocation3 [shape = 's32[1]{0}', space=sflag, size = 0x4, scoped, tag = 'scoped memory for tpu_custom_call.1']
    #allocation4 [shape = 's32[1]{0}', space=sflag, size = 0x4, scoped, tag = 'scoped memory for tpu_custom_call.1']
    #allocation5 [shape = 'u8[16384]{0}', space=vmem, size = 0x4000, scoped, tag = 'input window, operand 1, single buffered']
    #allocation6 [shape = 's32[1]{0}', space=sflag, size = 0x4, scoped, tag = 'scoped memory for tpu_custom_call.1']
    #allocation7 [shape = 'u8[4096]{0}', space=vmem, size = 0x1000, scoped, tag = 'output window, operand 0, single buffered']
    %8 = vsyncpa [#allocation3], 0
    %9 = vsyncpa [#allocation6], 0
    %10 = vsyncpa [#allocation4], 0
    // Predicated region
    $region2: #{tpu_custom_call.1} parent=1 // pred_check
      _
    $region3: #{tpu_custom_call.1} parent=1 // pred_check_branch
      %12 = sbr.rel (0) target = $region5
    $region4: #{tpu_custom_call.1} parent=1 // pred_region
      %s14 = ssub.s32 4096, 1024
      %15 = vsyncadd [#allocation3], %s14
      %s16 = sshll.u32 [#allocation2], 4
      %s17 = int_to_ptr.vmem [resolvable:$true] %s16
      %22 = dma.hbm_to_vmem [thread:$0]  %s0, 1024, %s17, [#allocation3], 128, 128, 8
    $region5: #{tpu_custom_call.1} parent=1 // pred_fallthru
      _
    // Predicated region
    $region6: #{tpu_custom_call.1} parent=1 // pred_check
      _
    $region7: #{tpu_custom_call.1} parent=1 // pred_check_branch
      %24 = sbr.rel (0) target = $region9
    $region8: #{tpu_custom_call.1} parent=1 // pred_region
      %s26 = ssub.s32 512, 512
      %27 = vsyncadd [#allocation6], %s26
      %s28 = sshll.u32 [#allocation5], 4
      %s29 = int_to_ptr.vmem [resolvable:$true] %s28
      %34 = dma.hbm_to_vmem [thread:$0]  %s1, 512, %s29, [#allocation6], 128, 128, 8
    $region9: #{tpu_custom_call.1} parent=1 // pred_fallthru
      _
    // Predicated region
    $region10: #{tpu_custom_call.1} parent=1 // pred_check
      _
    $region11: #{tpu_custom_call.1} parent=1 // pred_check_branch
      %36 = sbr.rel (0) target = $region13
    $region12: #{tpu_custom_call.1} parent=1 // pred_region
      _
    $region13: #{tpu_custom_call.1} parent=1 // pred_fallthru
      _
    // Predicated region
    $region14: #{tpu_custom_call.1} parent=1 // pred_check
      _
    $region15: #{tpu_custom_call.1} parent=1 // pred_check_branch
      %38 = sbr.rel (0) target = $region17
    $region16: #{tpu_custom_call.1} parent=1 // pred_region
      %39 = dma.done [#allocation3], 4096
    $region17: #{tpu_custom_call.1} parent=1 // pred_fallthru
      _
    // Predicated region
    $region18: #{tpu_custom_call.1} parent=1 // pred_check
      _
    $region19: #{tpu_custom_call.1} parent=1 // pred_check_branch
      %41 = sbr.rel (0) target = $region21
    $region20: #{tpu_custom_call.1} parent=1 // pred_region
      %42 = dma.done [#allocation6], 512
    $region21: #{tpu_custom_call.1} parent=1 // pred_fallthru
      _
    %v43 = vld [vmem:[#allocation2] sm:$0xff]
    %v44 = vld [vmem:[#allocation2 + $0x8] sm:$0xff]
    %v45 = vld [vmem:[#allocation2 + $0x10] sm:$0xff]
    %v46 = vld [vmem:[#allocation2 + $0x18] sm:$0xff]
    %v47 = vld [vmem:[#allocation2 + $0x20] sm:$0xff]
    %v48 = vld [vmem:[#allocation2 + $0x28] sm:$0xff]
    %v49 = vld [vmem:[#allocation2 + $0x30] sm:$0xff]
    %v50 = vld [vmem:[#allocation2 + $0x38] sm:$0xff]
    %v51 = vld [vmem:[#allocation2 + $0x40] sm:$0xff]
    %v52 = vld [vmem:[#allocation2 + $0x48] sm:$0xff]
    %v53 = vld [vmem:[#allocation2 + $0x50] sm:$0xff]
    %v54 = vld [vmem:[#allocation2 + $0x58] sm:$0xff]
    %v55 = vld [vmem:[#allocation2 + $0x60] sm:$0xff]
    %v56 = vld [vmem:[#allocation2 + $0x68] sm:$0xff]
    %v57 = vld [vmem:[#allocation2 + $0x70] sm:$0xff]
    %v58 = vld [vmem:[#allocation2 + $0x78] sm:$0xff]
    %v59 = vld [vmem:[#allocation2 + $0x80] sm:$0xff]
    %v60 = vld [vmem:[#allocation2 + $0x88] sm:$0xff]
    %v61 = vld [vmem:[#allocation2 + $0x90] sm:$0xff]
    %v62 = vld [vmem:[#allocation2 + $0x98] sm:$0xff]
    %v63 = vld [vmem:[#allocation2 + $0xa0] sm:$0xff]
    %v64 = vld [vmem:[#allocation2 + $0xa8] sm:$0xff]
    %v65 = vld [vmem:[#allocation2 + $0xb0] sm:$0xff]
    %v66 = vld [vmem:[#allocation2 + $0xb8] sm:$0xff]
    %v67 = vld [vmem:[#allocation2 + $0xc0] sm:$0xff]
    %v68 = vld [vmem:[#allocation2 + $0xc8] sm:$0xff]
    %v69 = vld [vmem:[#allocation2 + $0xd0] sm:$0xff]
    %v70 = vld [vmem:[#allocation2 + $0xd8] sm:$0xff]
    %v71 = vld [vmem:[#allocation2 + $0xe0] sm:$0xff]
    %v72 = vld [vmem:[#allocation2 + $0xe8] sm:$0xff]
    %v73 = vld [vmem:[#allocation2 + $0xf0] sm:$0xff]
    %v74 = vld [vmem:[#allocation2 + $0xf8] sm:$0xff]
    %vm75 = vcmask 523264
    %v76 = vsel %vm75, %v43, 0.0
    %77 = vadd.xlane.f32.xlu0 %v76
    %v78 = vpop.xlane.xlu0 %77
    %v79 = vsel %vm75, %v44, 0.0
    %80 = vadd.xlane.f32.xlu0 %v79
    %v81 = vpop.xlane.xlu0 %80
    %v82 = vsel %vm75, %v45, 0.0
    %83 = vadd.xlane.f32.xlu0 %v82
    %v84 = vpop.xlane.xlu0 %83
    %v85 = vsel %vm75, %v46, 0.0
    %86 = vadd.xlane.f32.xlu0 %v85
    %v87 = vpop.xlane.xlu0 %86
    %v88 = vsel %vm75, %v47, 0.0
    %89 = vadd.xlane.f32.xlu0 %v88
    %v90 = vpop.xlane.xlu0 %89
    %v91 = vsel %vm75, %v48, 0.0
    %92 = vadd.xlane.f32.xlu0 %v91
    %v93 = vpop.xlane.xlu0 %92
    %v94 = vsel %vm75, %v49, 0.0
    %95 = vadd.xlane.f32.xlu0 %v94
    %v96 = vpop.xlane.xlu0 %95
    %v97 = vsel %vm75, %v50, 0.0
    %98 = vadd.xlane.f32.xlu0 %v97
    %v99 = vpop.xlane.xlu0 %98
    %v100 = vsel %vm75, %v51, 0.0
    %101 = vadd.xlane.f32.xlu0 %v100
    %v102 = vpop.xlane.xlu0 %101
    %v103 = vsel %vm75, %v52, 0.0
    %104 = vadd.xlane.f32.xlu0 %v103
    %v105 = vpop.xlane.xlu0 %104
    %v106 = vsel %vm75, %v53, 0.0
    %107 = vadd.xlane.f32.xlu0 %v106
    %v108 = vpop.xlane.xlu0 %107
    %v109 = vsel %vm75, %v54, 0.0
    %110 = vadd.xlane.f32.xlu0 %v109
    %v111 = vpop.xlane.xlu0 %110
    %v112 = vsel %vm75, %v55, 0.0
    %113 = vadd.xlane.f32.xlu0 %v112
    %v114 = vpop.xlane.xlu0 %113
    %v115 = vsel %vm75, %v56, 0.0
    %116 = vadd.xlane.f32.xlu0 %v115
    %v117 = vpop.xlane.xlu0 %116
    %v118 = vsel %vm75, %v57, 0.0
    %119 = vadd.xlane.f32.xlu0 %v118
    %v120 = vpop.xlane.xlu0 %119
    %v121 = vsel %vm75, %v58, 0.0
    %122 = vadd.xlane.f32.xlu0 %v121
    %v123 = vpop.xlane.xlu0 %122
    %v124 = vsel %vm75, %v59, 0.0
    %125 = vadd.xlane.f32.xlu0 %v124
    %v126 = vpop.xlane.xlu0 %125
    %v127 = vsel %vm75, %v60, 0.0
    %128 = vadd.xlane.f32.xlu0 %v127
    %v129 = vpop.xlane.xlu0 %128
    %v130 = vsel %vm75, %v61, 0.0
    %131 = vadd.xlane.f32.xlu0 %v130
    %v132 = vpop.xlane.xlu0 %131
    %v133 = vsel %vm75, %v62, 0.0
    %134 = vadd.xlane.f32.xlu0 %v133
    %v135 = vpop.xlane.xlu0 %134
    %v136 = vsel %vm75, %v63, 0.0
    %137 = vadd.xlane.f32.xlu0 %v136
    %v138 = vpop.xlane.xlu0 %137
    %v139 = vsel %vm75, %v64, 0.0
    %140 = vadd.xlane.f32.xlu0 %v139
    %v141 = vpop.xlane.xlu0 %140
    %v142 = vsel %vm75, %v65, 0.0
    %143 = vadd.xlane.f32.xlu0 %v142
    %v144 = vpop.xlane.xlu0 %143
    %v145 = vsel %vm75, %v66, 0.0
    %146 = vadd.xlane.f32.xlu0 %v145
    %v147 = vpop.xlane.xlu0 %146
    %v148 = vsel %vm75, %v67, 0.0
    %149 = vadd.xlane.f32.xlu0 %v148
    %v150 = vpop.xlane.xlu0 %149
    %v151 = vsel %vm75, %v68, 0.0
    %152 = vadd.xlane.f32.xlu0 %v151
    %v153 = vpop.xlane.xlu0 %152
    %v154 = vsel %vm75, %v69, 0.0
    %155 = vadd.xlane.f32.xlu0 %v154
    %v156 = vpop.xlane.xlu0 %155
    %v157 = vsel %vm75, %v70, 0.0
    %158 = vadd.xlane.f32.xlu0 %v157
    %v159 = vpop.xlane.xlu0 %158
    %v160 = vsel %vm75, %v71, 0.0
    %161 = vadd.xlane.f32.xlu0 %v160
    %v162 = vpop.xlane.xlu0 %161
    %v163 = vsel %vm75, %v72, 0.0
    %164 = vadd.xlane.f32.xlu0 %v163
    %v165 = vpop.xlane.xlu0 %164
    %v166 = vsel %vm75, %v73, 0.0
    %167 = vadd.xlane.f32.xlu0 %v166
    %v168 = vpop.xlane.xlu0 %167
    %v169 = vsel %vm75, %v74, 0.0
    %170 = vadd.xlane.f32.xlu0 %v169
    %v171 = vpop.xlane.xlu0 %170
    %v172 = vmul.f32 %v78, 0.015625
    %v173 = vmul.f32 %v81, 0.015625
    %v174 = vmul.f32 %v84, 0.015625
    %v175 = vmul.f32 %v87, 0.015625
    %v176 = vmul.f32 %v90, 0.015625
    %v177 = vmul.f32 %v93, 0.015625
    %v178 = vmul.f32 %v96, 0.015625
    %v179 = vmul.f32 %v99, 0.015625
    %v180 = vmul.f32 %v102, 0.015625
    %v181 = vmul.f32 %v105, 0.015625
    %v182 = vmul.f32 %v108, 0.015625
    %v183 = vmul.f32 %v111, 0.015625
    %v184 = vmul.f32 %v114, 0.015625
    %v185 = vmul.f32 %v117, 0.015625
    %v186 = vmul.f32 %v120, 0.015625
    %v187 = vmul.f32 %v123, 0.015625
    %v188 = vmul.f32 %v126, 0.015625
    %v189 = vmul.f32 %v129, 0.015625
    %v190 = vmul.f32 %v132, 0.015625
    %v191 = vmul.f32 %v135, 0.015625
    %v192 = vmul.f32 %v138, 0.015625
    %v193 = vmul.f32 %v141, 0.015625
    %v194 = vmul.f32 %v144, 0.015625
    %v195 = vmul.f32 %v147, 0.015625
    %v196 = vmul.f32 %v150, 0.015625
    %v197 = vmul.f32 %v153, 0.015625
    %v198 = vmul.f32 %v156, 0.015625
    %v199 = vmul.f32 %v159, 0.015625
    %v200 = vmul.f32 %v162, 0.015625
    %v201 = vmul.f32 %v165, 0.015625
    %v202 = vmul.f32 %v168, 0.015625
    %v203 = vmul.f32 %v171, 0.015625
    %v204 = vld [vmem:[#allocation5] sm:$0xff]
    %v205 = vld [vmem:[#allocation5 + $0x8] sm:$0xff]
    %v206 = vld [vmem:[#allocation5 + $0x10] sm:$0xff]
    %v207 = vld [vmem:[#allocation5 + $0x18] sm:$0xff]
    %v208 = vld [vmem:[%s2] sm:$0x1]
    %v210 = vlaneseq
    %v211 = vshrl.u32 %v210, 7
    %v212 = vsub.s32 0, %v211
    %v213 = vrot.slane %v208, %v212
    %v247 = vlaneseq
    %v248 = vand.u32 %v247, 127
    %v249 = vlaneseq
    %v250 = vshrl.u32 %v249, 7
    %v251 = vsub.s32 %v248, %v250
    %v252 = vrot.slane %v172, %v251
    %v253 = vadd.s32 %v248, 4294967288
    %v254 = vlaneseq
    %v255 = vshrl.u32 %v254, 7
    %v256 = vsub.s32 %v253, %v255
    %v257 = vrot.slane %v173, %v256
    %vm258 = vcmask 130112
    %v259 = vsel %vm258, %v257, %v252
    %v260 = vadd.s32 %v248, 4294967280
    %v261 = vlaneseq
    %v262 = vshrl.u32 %v261, 7
    %v263 = vsub.s32 %v260, %v262
    %v264 = vrot.slane %v174, %v263
    %vm265 = vcmask 195712
    %v266 = vsel %vm265, %v264, %v259
    %v267 = vadd.s32 %v248, 4294967272
    %v268 = vlaneseq
    %v269 = vshrl.u32 %v268, 7
    %v270 = vsub.s32 %v267, %v269
    %v271 = vrot.slane %v175, %v270
    %vm272 = vcmask 261312
    %v273 = vsel %vm272, %v271, %v266
    %v274 = vlaneseq
    %v275 = vshrl.u32 %v274, 7
    %v276 = vsub.s32 %v248, %v275
    %v277 = vrot.slane %v176, %v276
    %v278 = vlaneseq
    %v279 = vshrl.u32 %v278, 7
    %v280 = vsub.s32 %v253, %v279
    %v281 = vrot.slane %v177, %v280
    %v282 = vsel %vm258, %v281, %v277
    %v283 = vlaneseq
    %v284 = vshrl.u32 %v283, 7
    %v285 = vsub.s32 %v260, %v284
    %v286 = vrot.slane %v178, %v285
    %v287 = vsel %vm265, %v286, %v282
    %v288 = vlaneseq
    %v289 = vshrl.u32 %v288, 7
    %v290 = vsub.s32 %v267, %v289
    %v291 = vrot.slane %v179, %v290
    %v292 = vsel %vm272, %v291, %v287
    %v293 = vlaneseq
    %v294 = vshrl.u32 %v293, 7
    %v295 = vsub.s32 %v248, %v294
    %v296 = vrot.slane %v180, %v295
    %v297 = vlaneseq
    %v298 = vshrl.u32 %v297, 7
    %v299 = vsub.s32 %v253, %v298
    %v300 = vrot.slane %v181, %v299
    %v301 = vsel %vm258, %v300, %v296
    %v302 = vlaneseq
    %v303 = vshrl.u32 %v302, 7
    %v304 = vsub.s32 %v260, %v303
    %v305 = vrot.slane %v182, %v304
    %v306 = vsel %vm265, %v305, %v301
    %v307 = vlaneseq
    %v308 = vshrl.u32 %v307, 7
    %v309 = vsub.s32 %v267, %v308
    %v310 = vrot.slane %v183, %v309
    %v311 = vsel %vm272, %v310, %v306
    %v312 = vlaneseq
    %v313 = vshrl.u32 %v312, 7
    %v314 = vsub.s32 %v248, %v313
    %v315 = vrot.slane %v184, %v314
    %v316 = vlaneseq
    %v317 = vshrl.u32 %v316, 7
    %v318 = vsub.s32 %v253, %v317
    %v319 = vrot.slane %v185, %v318
    %v320 = vsel %vm258, %v319, %v315
    %v321 = vlaneseq
    %v322 = vshrl.u32 %v321, 7
    %v323 = vsub.s32 %v260, %v322
    %v324 = vrot.slane %v186, %v323
    %v325 = vsel %vm265, %v324, %v320
    %v326 = vlaneseq
    %v327 = vshrl.u32 %v326, 7
    %v328 = vsub.s32 %v267, %v327
    %v329 = vrot.slane %v187, %v328
    %v330 = vsel %vm272, %v329, %v325
    %v331 = vlaneseq
    %v332 = vshrl.u32 %v331, 7
    %v333 = vsub.s32 %v248, %v332
    %v334 = vrot.slane %v188, %v333
    %v335 = vlaneseq
    %v336 = vshrl.u32 %v335, 7
    %v337 = vsub.s32 %v253, %v336
    %v338 = vrot.slane %v189, %v337
    %v339 = vsel %vm258, %v338, %v334
    %v340 = vlaneseq
    %v341 = vshrl.u32 %v340, 7
    %v342 = vsub.s32 %v260, %v341
    %v343 = vrot.slane %v190, %v342
    %v344 = vsel %vm265, %v343, %v339
    %v345 = vlaneseq
    %v346 = vshrl.u32 %v345, 7
    %v347 = vsub.s32 %v267, %v346
    %v348 = vrot.slane %v191, %v347
    %v349 = vsel %vm272, %v348, %v344
    %v350 = vlaneseq
    %v351 = vshrl.u32 %v350, 7
    %v352 = vsub.s32 %v248, %v351
    %v353 = vrot.slane %v192, %v352
    %v354 = vlaneseq
    %v355 = vshrl.u32 %v354, 7
    %v356 = vsub.s32 %v253, %v355
    %v357 = vrot.slane %v193, %v356
    %v358 = vsel %vm258, %v357, %v353
    %v359 = vlaneseq
    %v360 = vshrl.u32 %v359, 7
    %v361 = vsub.s32 %v260, %v360
    %v362 = vrot.slane %v194, %v361
    %v363 = vsel %vm265, %v362, %v358
    %v364 = vlaneseq
    %v365 = vshrl.u32 %v364, 7
    %v366 = vsub.s32 %v267, %v365
    %v367 = vrot.slane %v195, %v366
    %v368 = vsel %vm272, %v367, %v363
    %v369 = vlaneseq
    %v370 = vshrl.u32 %v369, 7
    %v371 = vsub.s32 %v248, %v370
    %v372 = vrot.slane %v196, %v371
    %v373 = vlaneseq
    %v374 = vshrl.u32 %v373, 7
    %v375 = vsub.s32 %v253, %v374
    %v376 = vrot.slane %v197, %v375
    %v377 = vsel %vm258, %v376, %v372
    %v378 = vlaneseq
    %v379 = vshrl.u32 %v378, 7
    %v380 = vsub.s32 %v260, %v379
    %v381 = vrot.slane %v198, %v380
    %v382 = vsel %vm265, %v381, %v377
    %v383 = vlaneseq
    %v384 = vshrl.u32 %v383, 7
    %v385 = vsub.s32 %v267, %v384
    %v386 = vrot.slane %v199, %v385
    %v387 = vsel %vm272, %v386, %v382
    %v388 = vlaneseq
    %v389 = vshrl.u32 %v388, 7
    %v390 = vsub.s32 %v248, %v389
    %v391 = vrot.slane %v200, %v390
    %v392 = vlaneseq
    %v393 = vshrl.u32 %v392, 7
    %v394 = vsub.s32 %v253, %v393
    %v395 = vrot.slane %v201, %v394
    %v396 = vsel %vm258, %v395, %v391
    %v397 = vlaneseq
    %v398 = vshrl.u32 %v397, 7
    %v399 = vsub.s32 %v260, %v398
    %v400 = vrot.slane %v202, %v399
    %v401 = vsel %vm265, %v400, %v396
    %v402 = vlaneseq
    %v403 = vshrl.u32 %v402, 7
    %v404 = vsub.s32 %v267, %v403
    %v405 = vrot.slane %v203, %v404
    %v406 = vsel %vm272, %v405, %v401
    %vm407 = vcmask 1041409
    %v408 = vsel %vm407, %v292, %v273
    %vm409 = vcmask 1042434
    %v410 = vsel %vm409, %v311, %v408
    %vm411 = vcmask 1043459
    %v412 = vsel %vm411, %v330, %v410
    %vm413 = vcmask 1044484
    %v414 = vsel %vm413, %v349, %v412
    %vm415 = vcmask 1045509
    %v416 = vsel %vm415, %v368, %v414
    %vm417 = vcmask 1046534
    %v418 = vsel %vm417, %v387, %v416
    %vm419 = vcmask 1047559
    %v420 = vsel %vm419, %v406, %v418
    %vm421 = vcmask 261120
    %v422 = vsel %vm421, %v420, 0
    %424 = vmatprep.subr.mxu0 0.0
    %425 = vmatpush1.msra.mxu0 0.0
    %426 = vmatprep.subr.mxu0 0.0
    %427 = vmatpush1.msra.mxu0 0.0
    %428 = vmatprep.subr.mxu0 0.0
    %429 = vmatpush1.msra.mxu0 0.0
    %430 = vmatprep.subr.mxu0 0.0
    %431 = vmatpush1.msra.mxu0 0.0
    %432 = vmatprep.subr.mxu0 0.0
    %433 = vmatpush1.msra.mxu0 0.0
    %434 = vmatprep.subr.mxu0 0.0
    %435 = vmatpush1.msra.mxu0 0.0
    %436 = vmatprep.subr.mxu0 0.0
    %437 = vmatpush1.msra.mxu0 0.0
    %438 = vmatprep.subr.mxu0 0.0
    %439 = vmatpush1.msra.mxu0 0.0
    %440 = vmatprep.subr.mxu0 0.0
    %441 = vmatpush1.msra.mxu0 0.0
    %442 = vmatprep.subr.mxu0 0.0
    %443 = vmatpush1.msra.mxu0 0.0
    %444 = vmatprep.subr.mxu0 0.0
    %445 = vmatpush1.msra.mxu0 0.0
    %446 = vmatprep.subr.mxu0 0.0
    %447 = vmatpush1.msra.mxu0 0.0
    %448 = vmatprep.subr.mxu0 0.0
    %449 = vmatpush1.msra.mxu0 %v207
    %450 = vmatprep.subr.mxu0 0.0
    %451 = vmatpush1.msra.mxu0 %v206
    %452 = vmatprep.subr.mxu0 0.0
    %453 = vmatpush1.msra.mxu0 %v205
    %454 = vmatprep.subr.mxu0 0.0
    %455 = vmatpush1.msra.mxu0 %v204
    %456 = vmatprep.subr.mxu0 0.0
    %457 = vmatpush2.msra.mxu0 0.0
    %458 = vmatprep.subr.mxu0 0.0
    %459 = vmatpush2.msra.mxu0 0.0
    %460 = vmatprep.subr.mxu0 0.0
    %461 = vmatpush2.msra.mxu0 0.0
    %462 = vmatprep.subr.mxu0 0.0
    %463 = vmatpush2.msra.mxu0 0.0
    %464 = vmatprep.subr.mxu0 0.0
    %465 = vmatpush2.msra.mxu0 0.0
    %466 = vmatprep.subr.mxu0 0.0
    %467 = vmatpush2.msra.mxu0 0.0
    %468 = vmatprep.subr.mxu0 0.0
    %469 = vmatpush2.msra.mxu0 0.0
    %470 = vmatprep.subr.mxu0 0.0
    %471 = vmatpush2.msra.mxu0 0.0
    %472 = vmatprep.subr.mxu0 0.0
    %473 = vmatpush2.msra.mxu0 0.0
    %474 = vmatprep.subr.mxu0 0.0
    %475 = vmatpush2.msra.mxu0 0.0
    %476 = vmatprep.subr.mxu0 0.0
    %477 = vmatpush2.msra.mxu0 0.0
    %478 = vmatprep.subr.mxu0 0.0
    %479 = vmatpush2.msra.mxu0 0.0
    %480 = vmatprep.subr.mxu0 0.0
    %481 = vmatpush2.msra.mxu0 0.0
    %482 = vmatprep.subr.mxu0 0.0
    %483 = vmatpush2.msra.mxu0 0.0
    %484 = vmatprep.subr.mxu0 0.0
    %485 = vmatpush2.msra.mxu0 0.0
    %486 = vmatprep.subr.mxu0 0.0
    %487 = vmatpush2.msra.mxu0 0.0
    %488 = vmatprep.mubr.f32.mxu0 0.0
    %489 = vmatmul.mubr.f32.gmra.mxu0 %v422
    %v490 = vpop.f32.mrf.mxu0
    %v491 = vadd.f32 %v213, %v490
    %v492 = vpop.f32.mrf.mxu0
    %493 = vdwg.mxu0
    %494 = vst [vmem:[#allocation7] sm:$0xff] %v491
    // Predicated region
    $region22: #{tpu_custom_call.1} parent=1 // pred_check
      _
    $region23: #{tpu_custom_call.1} parent=1 // pred_check_branch
      %496 = sbr.rel (0) target = $region25
    $region24: #{tpu_custom_call.1} parent=1 // pred_region
      %s498 = ssub.s32 128, 128
      %499 = vsyncadd [#allocation4], %s498
      %s501 = sshll.u32 [#allocation7], 4
      %s502 = int_to_ptr.vmem [resolvable:$true] %s501
      %504 = dma.vmem_to_hbm [thread:$0]  %s502, 128, %s3, [#allocation4]
    $region25: #{tpu_custom_call.1} parent=1 // pred_fallthru
      _
    // Predicated region
    $region26: #{tpu_custom_call.1} parent=1 // pred_check
      _
    $region27: #{tpu_custom_call.1} parent=1 // pred_check_branch
      %506 = sbr.rel (0) target = $region29
    $region28: #{tpu_custom_call.1} parent=1 // pred_region
      %507 = dma.done [#allocation4], 128
    $region29: #{tpu_custom_call.1} parent=1 // pred_fallthru
      _
    %508 = vsyncpa [#allocation3], 1
    %509 = vsyncpa [#allocation6], 1
    %510 = vsyncpa [#allocation4], 1

</llo_original>
